<compile_context>
chip_gen: v7x
topology: tpu7x:2x2x1
jax: 0.10.0
libtpu: 0.0.40
codegen_flags: <defaults>
</compile_context>

<pallas_src>
import functools

import jax
import jax.numpy as jnp
from jax.experimental import pallas as pl
from jax.experimental.pallas import tpu as pltpu

# Logical layer widths of the PyTorch module.
H1, H2, H3 = 15, 8, 1
# Padded widths: hidden units sit on the sublane axis -> pad to the 8-row f32
# sublane granularity only (15 -> 16, 8 -> 8), not to 128 lanes.
H1P, H2P = 16, 8

MAX_TILE_B = 8192              # upper bound on batch rows per grid step
SINGLE_TILE_MAX = 2048         # below this, do the whole batch in one step
VMEM_BUDGET_BYTES = 6 * 1024 * 1024   # soft budget for per-step buffers


def _round_up(n, m):
    return (n + m - 1) // m * m


def _choose_tile(batch, in_dim):
    """Pick (tile_b, num_tiles) for the 1-D batch grid.

    * Small batches: a single tile equal to the full array (block == array
      dims, so no (8,128) divisibility constraints and zero padding anywhere).
    * Large batches: lane-dense multiple-of-128 tiles, at least 2 of them so
      the "parallel" axis can shard across both TensorCores on v7x.  The last
      tile may be ragged; Pallas masks out-of-range output lanes on writeback
      and the undefined input rows only affect those never-written lanes.
    * tile size is capped so x double-buffer + f32 intermediates stay well
      under the default scoped VMEM limit on every chip generation.
    """
    per_row = in_dim * 4 * 2 + (H1P + H2P + 2) * 4
    cap = (VMEM_BUDGET_BYTES // per_row) // 128 * 128
    cap = max(128, min(MAX_TILE_B, cap))
    if batch <= min(cap, SINGLE_TILE_MAX):
        return batch, 1
    tile_b = min(cap, _round_up(pl.cdiv(batch, 2), 128))
    return tile_b, pl.cdiv(batch, tile_b)


def mlp_relu_kernel(x_ref, w1t_ref, b1_ref, w2t_ref, b2_ref, w3t_ref, b3_ref,
                    o_ref):
    """One batch tile of Linear->ReLU x3, computed transposed (batch on lanes).

    x_ref   : (tile_b, in_dim) f32  -- streamed per grid step
    w1t_ref : (H1P, in_dim)    f32  -- VMEM-resident (constant index_map)
    b1_ref  : (H1P, 1)         f32
    w2t_ref : (H2P, H1P)       f32
    b2_ref  : (H2P, 1)         f32
    w3t_ref : (1, H2P)         f32
    b3_ref  : (1,)             f32  -- scalar in SMEM
    o_ref   : (1, tile_b)      f32  -- lane-dense output row (batch on lanes)
    """
    x = x_ref[...]

    # h1^T = W1^T . x^T : contract the in_dim axis of both operands, so the
    # result is already batch-on-lanes and x needs no layout change.
    h1t = jax.lax.dot_general(
        w1t_ref[...], x,
        dimension_numbers=(((1,), (1,)), ((), ())),
        preferred_element_type=jnp.float32)                      # (H1P, tile_b)
    h1t = jnp.maximum(h1t + b1_ref[...], 0.0)

    h2t = jnp.dot(w2t_ref[...], h1t,
                  preferred_element_type=jnp.float32)            # (H2P, tile_b)
    h2t = jnp.maximum(h2t + b2_ref[...], 0.0)

    yt = jnp.dot(w3t_ref[...], h2t,
                 preferred_element_type=jnp.float32)             # (1, tile_b)
    o_ref[...] = jnp.maximum(yt + b3_ref[0], 0.0)


@jax.jit
def mlp_forward(x, kernel_params):
    w1t, b1c, w2t, b2c, w3t, b3s = kernel_params
    batch, in_dim = x.shape
    if x.dtype != jnp.float32:
        x = x.astype(jnp.float32)

    tile_b, num_tiles = _choose_tile(batch, in_dim)

    out_row = pl.pallas_call(
        mlp_relu_kernel,
        out_shape=jax.ShapeDtypeStruct((1, batch), jnp.float32),
        grid=(num_tiles,),
        in_specs=[
            pl.BlockSpec((tile_b, in_dim), lambda i: (i, 0)),    # x: streamed
            pl.BlockSpec((H1P, in_dim), lambda i: (0, 0)),       # W1^T resident
            pl.BlockSpec((H1P, 1), lambda i: (0, 0)),            # b1
            pl.BlockSpec((H2P, H1P), lambda i: (0, 0)),          # W2^T resident
            pl.BlockSpec((H2P, 1), lambda i: (0, 0)),            # b2
            pl.BlockSpec((1, H2P), lambda i: (0, 0)),            # w3^T resident
            pl.BlockSpec(memory_space=pltpu.MemorySpace.SMEM),   # b3 scalar
        ],
        out_specs=pl.BlockSpec((1, tile_b), lambda i: (0, i)),   # lane-dense
        compiler_params=pltpu.CompilerParams(
            dimension_semantics=("parallel",),
        ),
    )(x, w1t, b1c, w2t, b2c, w3t, b3s)

    return out_row.reshape(batch, 1)


def init_params(key, input_feature_amount):
    """Logical (unpadded) params mimicking nn.Linear's U(-1/sqrt(fan_in),...)."""
    dims = [(input_feature_amount, H1), (H1, H2), (H2, H3)]
    params = []
    for fan_in, fan_out in dims:
        key, kw, kb = jax.random.split(key, 3)
        bound = 1.0 / (fan_in ** 0.5)
        w = jax.random.uniform(kw, (fan_in, fan_out), jnp.float32, -bound, bound)
        b = jax.random.uniform(kb, (fan_out,), jnp.float32, -bound, bound)
        params.append((w, b))
    return params


def prepare_kernel_params(params):
    """Transpose weights (hidden on sublanes), zero-pad 15->16, keep f32."""
    (w1, b1), (w2, b2), (w3, b3) = params
    in_dim = w1.shape[0]
    w1t = jnp.zeros((H1P, in_dim), jnp.float32).at[:H1, :].set(w1.T)
    b1c = jnp.zeros((H1P, 1), jnp.float32).at[:H1, 0].set(b1)
    w2t = jnp.zeros((H2P, H1P), jnp.float32).at[:H2, :H1].set(w2.T)
    b2c = jnp.zeros((H2P, 1), jnp.float32).at[:H2, 0].set(b2)
    w3t = jnp.zeros((1, H2P), jnp.float32).at[0, :H2].set(w3[:, 0])
    b3s = b3.astype(jnp.float32).reshape((1,))
    return w1t, b1c, w2t, b2c, w3t, b3s


def reference_forward(x, params):
    """Pure-f32 reference with the exact PyTorch module semantics."""
    h = x
    for w, b in params:
        h = jnp.maximum(h @ w + b, 0.0)
    return h


if __name__ == "__main__":
    key = jax.random.PRNGKey(0)
    kx, kx2, kp = jax.random.split(key, 3)

    input_feature_amount = 16
    params = init_params(kp, input_feature_amount)
    kernel_params = prepare_kernel_params(params)

    # Small single-tile case.
    batch = 8
    x = jax.random.normal(kx, (batch, input_feature_amount), jnp.float32)
    out = jax.block_until_ready(mlp_forward(x, kernel_params))
    ref = reference_forward(x, params)
    assert out.shape == (batch, 1), out.shape
    assert jnp.allclose(out, ref, atol=1e-2, rtol=1e-2), \
        float(jnp.max(jnp.abs(out - ref)))

    # Multi-tile case with a ragged last tile (exercises grid + edge masking).
    batch2 = 2500
    x2 = jax.random.normal(kx2, (batch2, input_feature_amount), jnp.float32)
    out2 = jax.block_until_ready(mlp_forward(x2, kernel_params))
    ref2 = reference_forward(x2, params)
    assert out2.shape == (batch2, 1), out2.shape
    assert jnp.allclose(out2, ref2, atol=1e-2, rtol=1e-2), \
        float(jnp.max(jnp.abs(out2 - ref2)))

    print("KERNEL_OK")
</pallas_src>

<mosaic_0001>
module attributes {stable_mosaic.version = 11 : i64} {
  func.func @mlp_relu_kernel(%arg0: i32, %arg1: memref<8x16xf32, #tpu.memory_space<vmem>>, %arg2: memref<16x16xf32, #tpu.memory_space<vmem>>, %arg3: memref<16x1xf32, #tpu.memory_space<vmem>>, %arg4: memref<8x16xf32, #tpu.memory_space<vmem>>, %arg5: memref<8x1xf32, #tpu.memory_space<vmem>>, %arg6: memref<1x8xf32, #tpu.memory_space<vmem>>, %arg7: memref<1xf32, #tpu.memory_space<smem>>, %arg8: memref<1x8xf32, #tpu.memory_space<vmem>>) attributes {dimension_semantics = [#tpu.dimension_semantics<parallel>], iteration_bounds = array<i64: 1>, scalar_prefetch = 0 : i64, scratch_operands = 0 : i64, tpu.core_type = #tpu.core_type<tc>, window_params = [{transform_indices = @transform_0, window_bounds = array<i64: 8, 16>}, {pipeline_mode = #tpu.pipeline_mode<synchronous>, transform_indices = @transform_1, window_bounds = array<i64: 16, 16>}, {pipeline_mode = #tpu.pipeline_mode<synchronous>, transform_indices = @transform_2, window_bounds = array<i64: 16, 1>}, {pipeline_mode = #tpu.pipeline_mode<synchronous>, transform_indices = @transform_3, window_bounds = array<i64: 8, 16>}, {pipeline_mode = #tpu.pipeline_mode<synchronous>, transform_indices = @transform_4, window_bounds = array<i64: 8, 1>}, {pipeline_mode = #tpu.pipeline_mode<synchronous>, transform_indices = @transform_5, window_bounds = array<i64: 1, 8>}, {transform_indices = @transform_6, window_bounds = array<i64: 1>}, {transform_indices = @transform_7, window_bounds = array<i64: 1, 8>}]} {
    %c0 = arith.constant 0 : index
    %c0_0 = arith.constant 0 : index
    %0 = vector.load %arg1[%c0, %c0_0] : memref<8x16xf32, #tpu.memory_space<vmem>>, vector<8x16xf32>
    %c0_1 = arith.constant 0 : index
    %c0_2 = arith.constant 0 : index
    %1 = vector.load %arg2[%c0_1, %c0_2] : memref<16x16xf32, #tpu.memory_space<vmem>>, vector<16x16xf32>
    %cst = arith.constant dense<0.000000e+00> : vector<16x8xf32>
    %2 = tpu.matmul %1, %0, %cst {dimension_numbers = #tpu.dot_dimension_numbers<[1], [1], [0], [0], [0, 0, 1, 0], [], []>} : vector<16x16xf32>, vector<8x16xf32>, vector<16x8xf32> -> vector<16x8xf32>
    %c0_3 = arith.constant 0 : index
    %c0_4 = arith.constant 0 : index
    %3 = vector.load %arg3[%c0_3, %c0_4] : memref<16x1xf32, #tpu.memory_space<vmem>>, vector<16x1xf32>
    %4 = vector.broadcast %3 : vector<16x1xf32> to vector<16x8xf32>
    %5 = arith.addf %2, %4 : vector<16x8xf32>
    %cst_5 = arith.constant 0.000000e+00 : f32
    %6 = vector.broadcast %cst_5 : f32 to vector<16x8xf32>
    %7 = arith.maximumf %5, %6 : vector<16x8xf32>
    %c0_6 = arith.constant 0 : index
    %c0_7 = arith.constant 0 : index
    %8 = vector.load %arg4[%c0_6, %c0_7] : memref<8x16xf32, #tpu.memory_space<vmem>>, vector<8x16xf32>
    %cst_8 = arith.constant dense<0.000000e+00> : vector<8x8xf32>
    %9 = tpu.matmul %8, %7, %cst_8 {dimension_numbers = #tpu.dot_dimension_numbers<[1], [0], [0], [1], [0, 0, 1, 1], [], []>} : vector<8x16xf32>, vector<16x8xf32>, vector<8x8xf32> -> vector<8x8xf32>
    %c0_9 = arith.constant 0 : index
    %c0_10 = arith.constant 0 : index
    %10 = vector.load %arg5[%c0_9, %c0_10] : memref<8x1xf32, #tpu.memory_space<vmem>>, vector<8x1xf32>
    %11 = vector.broadcast %10 : vector<8x1xf32> to vector<8x8xf32>
    %12 = arith.addf %9, %11 : vector<8x8xf32>
    %cst_11 = arith.constant 0.000000e+00 : f32
    %13 = vector.broadcast %cst_11 : f32 to vector<8x8xf32>
    %14 = arith.maximumf %12, %13 : vector<8x8xf32>
    %c0_12 = arith.constant 0 : index
    %c0_13 = arith.constant 0 : index
    %15 = vector.load %arg6[%c0_12, %c0_13] : memref<1x8xf32, #tpu.memory_space<vmem>>, vector<1x8xf32>
    %cst_14 = arith.constant dense<0.000000e+00> : vector<1x8xf32>
    %16 = tpu.matmul %15, %14, %cst_14 {dimension_numbers = #tpu.dot_dimension_numbers<[1], [0], [0], [1], [0, 0, 1, 1], [], []>} : vector<1x8xf32>, vector<8x8xf32>, vector<1x8xf32> -> vector<1x8xf32>
    %c0_15 = arith.constant 0 : index
    %17 = memref.load %arg7[%c0_15] : memref<1xf32, #tpu.memory_space<smem>>
    %18 = vector.broadcast %17 : f32 to vector<1x8xf32>
    %19 = arith.addf %16, %18 : vector<1x8xf32>
    %cst_16 = arith.constant 0.000000e+00 : f32
    %20 = vector.broadcast %cst_16 : f32 to vector<1x8xf32>
    %21 = arith.maximumf %19, %20 : vector<1x8xf32>
    %c0_17 = arith.constant 0 : index
    %c0_18 = arith.constant 0 : index
    %22 = vector.load %arg8[%c0_17, %c0_18] : memref<1x8xf32, #tpu.memory_space<vmem>>, vector<1x8xf32>
    tpu.vector_store %arg8[%c0_17, %c0_18], %21 {strides = array<i32>} : memref<1x8xf32, #tpu.memory_space<vmem>>, vector<1x8xf32>,
    return
  }
  func.func @transform_0(%arg0: i32) -> (i32, i32) {
    %c0_i32 = arith.constant 0 : i32
    %c0_i32_0 = arith.constant 0 : i32
    return %arg0, %c0_i32 : i32, i32
  }
  func.func @transform_1(%arg0: i32) -> (i32, i32) {
    %c0_i32 = arith.constant 0 : i32
    %c0_i32_0 = arith.constant 0 : i32
    %c0_i32_1 = arith.constant 0 : i32
    return %c0_i32, %c0_i32_0 : i32, i32
  }
  func.func @transform_2(%arg0: i32) -> (i32, i32) {
    %c0_i32 = arith.constant 0 : i32
    %c0_i32_0 = arith.constant 0 : i32
    %c0_i32_1 = arith.constant 0 : i32
    return %c0_i32, %c0_i32_0 : i32, i32
  }
  func.func @transform_3(%arg0: i32) -> (i32, i32) {
    %c0_i32 = arith.constant 0 : i32
    %c0_i32_0 = arith.constant 0 : i32
    %c0_i32_1 = arith.constant 0 : i32
    return %c0_i32, %c0_i32_0 : i32, i32
  }
  func.func @transform_4(%arg0: i32) -> (i32, i32) {
    %c0_i32 = arith.constant 0 : i32
    %c0_i32_0 = arith.constant 0 : i32
    %c0_i32_1 = arith.constant 0 : i32
    return %c0_i32, %c0_i32_0 : i32, i32
  }
  func.func @transform_5(%arg0: i32) -> (i32, i32) {
    %c0_i32 = arith.constant 0 : i32
    %c0_i32_0 = arith.constant 0 : i32
    %c0_i32_1 = arith.constant 0 : i32
    return %c0_i32, %c0_i32_0 : i32, i32
  }
  func.func @transform_6(%arg0: i32) -> i32 {
    %c0_i32 = arith.constant 0 : i32
    %c0_i32_0 = arith.constant 0 : i32
    return %c0_i32 : i32
  }
  func.func @transform_7(%arg0: i32) -> (i32, i32) {
    %c0_i32 = arith.constant 0 : i32
    %c0_i32_0 = arith.constant 0 : i32
    return %c0_i32, %arg0 : i32, i32
  }
}

</mosaic_0001>

<llo_original>
// kernel: mlp_forward.1
$region0: #{mlp_forward.1}
  #allocation0 [shape = 'u32[]', space=smem, size = 0x4, offset = 0x4, fixed_abs, tag = 'smem constant byte address 0x4 - core index']
  #allocation1 [shape = 'u32[144,128]{1,0:T(1,128)}', space=vmem, size = 0x12000, scoped, tag = 'internal scratch']
  #allocation2 [shape = 'f32[1]{0:T(128)S(6)}', space=smem, size = 0x200, scoped, tag = 'scoped memory for mlp_forward.1']
  %s0 = inlined_call_operand.vmem [shape: f32[8,16], index: 0, kind: input, shape index: {}]
  %s1 = inlined_call_operand.vmem [shape: f32[16,16], index: 1, kind: input, shape index: {}]
  %s2 = inlined_call_operand.vmem [shape: f32[16,1], index: 2, kind: input, shape index: {}]
  %s3 = inlined_call_operand.vmem [shape: f32[8,16], index: 3, kind: input, shape index: {}]
  %s4 = inlined_call_operand.vmem [shape: f32[8,1], index: 4, kind: input, shape index: {}]
  %s5 = inlined_call_operand.vmem [shape: f32[1,8], index: 5, kind: input, shape index: {}]
  %s6 = inlined_call_operand.<no memory space> [shape: f32[1], index: 6, kind: input, shape index: {}]
  %s7 = inlined_call_operand.hbm [shape: f32[1,8], index: 7, kind: output, shape index: {}]
  %s8 = sld [smem:[#allocation0]]
  $region38: #{mlp_forward.1} parent=0
    _
  %s10 = ssub.s32 1, %s8
  %s11 = scalar_select 0, %s10, %s8
  %12 = sst [smem:[#allocation2]] %s6
  $region1: #{mlp_forward.1} parent=0
    #allocation3 [shape = 'u8[512]{0}', space=vmem, size = 0x400, scoped, tag = 'output window, operand 0, single buffered']
    #allocation4 [shape = 's32[1]{0}', space=sflag, size = 0x4, scoped, tag = 'scoped memory for mlp_forward.1']
    %13 = vsyncpa [#allocation4], 0
    // Predicated region
    $region2: #{mlp_forward.1} parent=1 // pred_check
      _
    $region3: #{mlp_forward.1} parent=1 // pred_check_branch
      %15 = sbr.rel (0) target = $region5
    $region4: #{mlp_forward.1} parent=1 // pred_region
      _
    $region5: #{mlp_forward.1} parent=1 // pred_fallthru
      _
    // Predicated region
    $region6: #{mlp_forward.1} parent=1 // pred_check
      _
    $region7: #{mlp_forward.1} parent=1 // pred_check_branch
      %17 = sbr.rel (0) target = $region9
    $region8: #{mlp_forward.1} parent=1 // pred_region
      _
    $region9: #{mlp_forward.1} parent=1 // pred_fallthru
      _
    // Predicated region
    $region10: #{mlp_forward.1} parent=1 // pred_check
      _
    $region11: #{mlp_forward.1} parent=1 // pred_check_branch
      %19 = sbr.rel (0) target = $region13
    $region12: #{mlp_forward.1} parent=1 // pred_region
      _
    $region13: #{mlp_forward.1} parent=1 // pred_fallthru
      _
    // Predicated region
    $region14: #{mlp_forward.1} parent=1 // pred_check
      _
    $region15: #{mlp_forward.1} parent=1 // pred_check_branch
      %21 = sbr.rel (0) target = $region17
    $region16: #{mlp_forward.1} parent=1 // pred_region
      _
    $region17: #{mlp_forward.1} parent=1 // pred_fallthru
      _
    // Predicated region
    $region18: #{mlp_forward.1} parent=1 // pred_check
      _
    $region19: #{mlp_forward.1} parent=1 // pred_check_branch
      %23 = sbr.rel (0) target = $region21
    $region20: #{mlp_forward.1} parent=1 // pred_region
      _
    $region21: #{mlp_forward.1} parent=1 // pred_fallthru
      _
    // Predicated region
    $region22: #{mlp_forward.1} parent=1 // pred_check
      _
    $region23: #{mlp_forward.1} parent=1 // pred_check_branch
      %25 = sbr.rel (0) target = $region25
    $region24: #{mlp_forward.1} parent=1 // pred_region
      _
    $region25: #{mlp_forward.1} parent=1 // pred_fallthru
      _
    // Predicated region
    $region26: #{mlp_forward.1} parent=1 // pred_check
      _
    $region27: #{mlp_forward.1} parent=1 // pred_check_branch
      %27 = sbr.rel (0) target = $region29
    $region28: #{mlp_forward.1} parent=1 // pred_region
      _
    $region29: #{mlp_forward.1} parent=1 // pred_fallthru
      _
    %v28 = vld [vmem:[%s0] sm:$0xff]
    %v29 = vld [vmem:[%s1] sm:$0xff]
    %v30 = vld [vmem:[%s1 + $0x8] sm:$0xff]
    %v31 = vld [vmem:[%s2] sm:$0xff]
    %v32 = vld [vmem:[%s2 + $0x8] sm:$0xff]
    %34 = vset.pattern.permute.xlu0 0
    %35 = vperm.xlu0 %34, %v31
    %v36 = vpop.permute.xlu0 %35
    %39 = vset.pattern.permute.xlu0 0
    %40 = vperm.xlu0 %39, %v32
    %v41 = vpop.permute.xlu0 %40
    %vm43 = vcmask 130048
    %v45 = vsel %vm43, %v29, 0
    %v48 = vsel %vm43, %v30, 0
    %v51 = vsel %vm43, %v28, 0
    %53 = vmatprep.subr.mxu0 0.0
    %54 = vmatpush1.xpose.msra.mxu0 %v51
    %55 = vmatprep.subr.mxu0 0.0
    %56 = vmatpush1.xpose.msra.mxu0 0.0
    %57 = vmatprep.subr.mxu0 0.0
    %58 = vmatpush1.xpose.msra.mxu0 0.0
    %59 = vmatprep.subr.mxu0 0.0
    %60 = vmatpush1.xpose.msra.mxu0 0.0
    %61 = vmatprep.subr.mxu0 0.0
    %62 = vmatpush1.xpose.msra.mxu0 0.0
    %63 = vmatprep.subr.mxu0 0.0
    %64 = vmatpush1.xpose.msra.mxu0 0.0
    %65 = vmatprep.subr.mxu0 0.0
    %66 = vmatpush1.xpose.msra.mxu0 0.0
    %67 = vmatprep.subr.mxu0 0.0
    %68 = vmatpush1.xpose.msra.mxu0 0.0
    %69 = vmatprep.subr.mxu0 0.0
    %70 = vmatpush1.xpose.msra.mxu0 0.0
    %71 = vmatprep.subr.mxu0 0.0
    %72 = vmatpush1.xpose.msra.mxu0 0.0
    %73 = vmatprep.subr.mxu0 0.0
    %74 = vmatpush1.xpose.msra.mxu0 0.0
    %75 = vmatprep.subr.mxu0 0.0
    %76 = vmatpush1.xpose.msra.mxu0 0.0
    %77 = vmatprep.subr.mxu0 0.0
    %78 = vmatpush1.xpose.msra.mxu0 0.0
    %79 = vmatprep.subr.mxu0 0.0
    %80 = vmatpush1.xpose.msra.mxu0 0.0
    %81 = vmatprep.subr.mxu0 0.0
    %82 = vmatpush1.xpose.msra.mxu0 0.0
    %83 = vmatprep.subr.mxu0 0.0
    %84 = vmatpush1.xpose.msra.mxu0 0.0
    %85 = vmatprep.subr.mxu0 0.0
    %86 = vmatpush1.xpose.msra.mxu0 0.0
    %87 = vmatprep.subr.mxu0 0.0
    %88 = vmatpush1.xpose.msra.mxu0 0.0
    %89 = vmatprep.subr.mxu0 0.0
    %90 = vmatpush1.xpose.msra.mxu0 0.0
    %91 = vmatprep.subr.mxu0 0.0
    %92 = vmatpush1.xpose.msra.mxu0 0.0
    %93 = vmatprep.subr.mxu0 0.0
    %94 = vmatpush1.xpose.msra.mxu0 0.0
    %95 = vmatprep.subr.mxu0 0.0
    %96 = vmatpush1.xpose.msra.mxu0 0.0
    %97 = vmatprep.subr.mxu0 0.0
    %98 = vmatpush1.xpose.msra.mxu0 0.0
    %99 = vmatprep.subr.mxu0 0.0
    %100 = vmatpush1.xpose.msra.mxu0 0.0
    %101 = vmatprep.subr.mxu0 0.0
    %102 = vmatpush1.xpose.msra.mxu0 0.0
    %103 = vmatprep.subr.mxu0 0.0
    %104 = vmatpush1.xpose.msra.mxu0 0.0
    %105 = vmatprep.subr.mxu0 0.0
    %106 = vmatpush1.xpose.msra.mxu0 0.0
    %107 = vmatprep.subr.mxu0 0.0
    %108 = vmatpush1.xpose.msra.mxu0 0.0
    %109 = vmatprep.subr.mxu0 0.0
    %110 = vmatpush1.xpose.msra.mxu0 0.0
    %111 = vmatprep.subr.mxu0 0.0
    %112 = vmatpush1.xpose.msra.mxu0 0.0
    %113 = vmatprep.subr.mxu0 0.0
    %114 = vmatpush1.xpose.msra.mxu0 0.0
    %115 = vmatprep.subr.mxu0 0.0
    %116 = vmatpush1.xpose.msra.mxu0 0.0
    %117 = vmatprep.mubr.f32.mxu0 0.0
    %118 = vmatmul.mubr.f32.gmra.mrb[0].mxu0 %v45
    %v119 = vpop.f32.mrb[0].mxu0
    %v120 = vadd.f32 %v36, %v119
    %v121 = vpop.f32.mrb[0].mxu0
    %122 = vmatprep.mubr.f32.mxu0 0.0
    %123 = vmatmul.mubr.f32.gmra.mrb[0].mxu0 %v48
    %v124 = vpop.f32.mrb[0].mxu0
    %v125 = vadd.f32 %v41, %v124
    %v126 = vpop.f32.mrb[0].mxu0
    %127 = vdwg.mxu0
    %v128 = vmax.f32 %v120, 0.0
    %v129 = vmax.f32 %v125, 0.0
    %v130 = vld [vmem:[%s3] sm:$0xff]
    %v131 = vld [vmem:[%s4] sm:$0xff]
    %133 = vset.pattern.permute.xlu0 0
    %134 = vperm.xlu0 %133, %v131
    %v135 = vpop.permute.xlu0 %134
    %v138 = vsel %vm43, %v130, 0
    %140 = vmatprep.subr.mxu0 0.0
    %141 = vmatpush1.msra.mxu0 %v128
    %142 = vmatprep.subr.mxu0 0.0
    %143 = vmatpush1.msra.mxu0 %v129
    %144 = vmatprep.subr.mxu0 0.0
    %145 = vmatpush1.msra.mxu0 0.0
    %146 = vmatprep.subr.mxu0 0.0
    %147 = vmatpush1.msra.mxu0 0.0
    %148 = vmatprep.subr.mxu0 0.0
    %149 = vmatpush1.msra.mxu0 0.0
    %150 = vmatprep.subr.mxu0 0.0
    %151 = vmatpush1.msra.mxu0 0.0
    %152 = vmatprep.subr.mxu0 0.0
    %153 = vmatpush1.msra.mxu0 0.0
    %154 = vmatprep.subr.mxu0 0.0
    %155 = vmatpush1.msra.mxu0 0.0
    %156 = vmatprep.subr.mxu0 0.0
    %157 = vmatpush1.msra.mxu0 0.0
    %158 = vmatprep.subr.mxu0 0.0
    %159 = vmatpush1.msra.mxu0 0.0
    %160 = vmatprep.subr.mxu0 0.0
    %161 = vmatpush1.msra.mxu0 0.0
    %162 = vmatprep.subr.mxu0 0.0
    %163 = vmatpush1.msra.mxu0 0.0
    %164 = vmatprep.subr.mxu0 0.0
    %165 = vmatpush1.msra.mxu0 0.0
    %166 = vmatprep.subr.mxu0 0.0
    %167 = vmatpush1.msra.mxu0 0.0
    %168 = vmatprep.subr.mxu0 0.0
    %169 = vmatpush1.msra.mxu0 0.0
    %170 = vmatprep.subr.mxu0 0.0
    %171 = vmatpush1.msra.mxu0 0.0
    %172 = vmatprep.subr.mxu0 0.0
    %173 = vmatpush1.msra.mxu0 0.0
    %174 = vmatprep.subr.mxu0 0.0
    %175 = vmatpush1.msra.mxu0 0.0
    %176 = vmatprep.subr.mxu0 0.0
    %177 = vmatpush1.msra.mxu0 0.0
    %178 = vmatprep.subr.mxu0 0.0
    %179 = vmatpush1.msra.mxu0 0.0
    %180 = vmatprep.subr.mxu0 0.0
    %181 = vmatpush1.msra.mxu0 0.0
    %182 = vmatprep.subr.mxu0 0.0
    %183 = vmatpush1.msra.mxu0 0.0
    %184 = vmatprep.subr.mxu0 0.0
    %185 = vmatpush1.msra.mxu0 0.0
    %186 = vmatprep.subr.mxu0 0.0
    %187 = vmatpush1.msra.mxu0 0.0
    %188 = vmatprep.subr.mxu0 0.0
    %189 = vmatpush1.msra.mxu0 0.0
    %190 = vmatprep.subr.mxu0 0.0
    %191 = vmatpush1.msra.mxu0 0.0
    %192 = vmatprep.subr.mxu0 0.0
    %193 = vmatpush1.msra.mxu0 0.0
    %194 = vmatprep.subr.mxu0 0.0
    %195 = vmatpush1.msra.mxu0 0.0
    %196 = vmatprep.subr.mxu0 0.0
    %197 = vmatpush1.msra.mxu0 0.0
    %198 = vmatprep.subr.mxu0 0.0
    %199 = vmatpush1.msra.mxu0 0.0
    %200 = vmatprep.subr.mxu0 0.0
    %201 = vmatpush1.msra.mxu0 0.0
    %202 = vmatprep.subr.mxu0 0.0
    %203 = vmatpush1.msra.mxu0 0.0
    %204 = vmatprep.mubr.f32.mxu0 0.0
    %205 = vmatmul.mubr.f32.gmra.mrb[0].mxu0 %v138
    %v206 = vpop.f32.mrb[0].mxu0
    %v207 = vadd.f32 %v135, %v206
    %v208 = vpop.f32.mrb[0].mxu0
    %209 = vdwg.mxu0
    %v210 = vmax.f32 %v207, 0.0
    %v211 = vld [vmem:[%s5] sm:$0x1]
    %s212 = sld [smem:[#allocation2]]
    %v213 = vstv %s212
    %vm214 = vcmask 64512
    %v216 = vsel %vm214, %v211, 0
    %218 = vmatprep.subr.mxu0 0.0
    %219 = vmatpush1.msra.mxu0 %v210
    %220 = vmatprep.subr.mxu0 0.0
    %221 = vmatpush1.msra.mxu0 0.0
    %222 = vmatprep.subr.mxu0 0.0
    %223 = vmatpush1.msra.mxu0 0.0
    %224 = vmatprep.subr.mxu0 0.0
    %225 = vmatpush1.msra.mxu0 0.0
    %226 = vmatprep.subr.mxu0 0.0
    %227 = vmatpush1.msra.mxu0 0.0
    %228 = vmatprep.subr.mxu0 0.0
    %229 = vmatpush1.msra.mxu0 0.0
    %230 = vmatprep.subr.mxu0 0.0
    %231 = vmatpush1.msra.mxu0 0.0
    %232 = vmatprep.subr.mxu0 0.0
    %233 = vmatpush1.msra.mxu0 0.0
    %234 = vmatprep.subr.mxu0 0.0
    %235 = vmatpush1.msra.mxu0 0.0
    %236 = vmatprep.subr.mxu0 0.0
    %237 = vmatpush1.msra.mxu0 0.0
    %238 = vmatprep.subr.mxu0 0.0
    %239 = vmatpush1.msra.mxu0 0.0
    %240 = vmatprep.subr.mxu0 0.0
    %241 = vmatpush1.msra.mxu0 0.0
    %242 = vmatprep.subr.mxu0 0.0
    %243 = vmatpush1.msra.mxu0 0.0
    %244 = vmatprep.subr.mxu0 0.0
    %245 = vmatpush1.msra.mxu0 0.0
    %246 = vmatprep.subr.mxu0 0.0
    %247 = vmatpush1.msra.mxu0 0.0
    %248 = vmatprep.subr.mxu0 0.0
    %249 = vmatpush1.msra.mxu0 0.0
    %250 = vmatprep.subr.mxu0 0.0
    %251 = vmatpush1.msra.mxu0 0.0
    %252 = vmatprep.subr.mxu0 0.0
    %253 = vmatpush1.msra.mxu0 0.0
    %254 = vmatprep.subr.mxu0 0.0
    %255 = vmatpush1.msra.mxu0 0.0
    %256 = vmatprep.subr.mxu0 0.0
    %257 = vmatpush1.msra.mxu0 0.0
    %258 = vmatprep.subr.mxu0 0.0
    %259 = vmatpush1.msra.mxu0 0.0
    %260 = vmatprep.subr.mxu0 0.0
    %261 = vmatpush1.msra.mxu0 0.0
    %262 = vmatprep.subr.mxu0 0.0
    %263 = vmatpush1.msra.mxu0 0.0
    %264 = vmatprep.subr.mxu0 0.0
    %265 = vmatpush1.msra.mxu0 0.0
    %266 = vmatprep.subr.mxu0 0.0
    %267 = vmatpush1.msra.mxu0 0.0
    %268 = vmatprep.subr.mxu0 0.0
    %269 = vmatpush1.msra.mxu0 0.0
    %270 = vmatprep.subr.mxu0 0.0
    %271 = vmatpush1.msra.mxu0 0.0
    %272 = vmatprep.subr.mxu0 0.0
    %273 = vmatpush1.msra.mxu0 0.0
    %274 = vmatprep.subr.mxu0 0.0
    %275 = vmatpush1.msra.mxu0 0.0
    %276 = vmatprep.subr.mxu0 0.0
    %277 = vmatpush1.msra.mxu0 0.0
    %278 = vmatprep.subr.mxu0 0.0
    %279 = vmatpush1.msra.mxu0 0.0
    %280 = vmatprep.subr.mxu0 0.0
    %281 = vmatpush1.msra.mxu0 0.0
    %282 = vmatprep.mubr.f32.mxu0 0.0
    %283 = vmatmul.mubr.f32.gmra.mrb[0].mxu0 %v216
    %v284 = vpop.f32.mrb[0].mxu0
    %v285 = vadd.f32 %v213, %v284
    %v286 = vpop.f32.mrb[0].mxu0
    %287 = vdwg.mxu0
    %v288 = vmax.f32 %v285, 0.0
    %vm289 = vcmask 57344
    %290 = vst.msk [vmem:[#allocation3] sm:$0x1] %vm289, %v288
    // Predicated region
    $region30: #{mlp_forward.1} parent=1 // pred_check
      _
    $region31: #{mlp_forward.1} parent=1 // pred_check_branch
      %292 = sbr.rel (0) target = $region33
    $region32: #{mlp_forward.1} parent=1 // pred_region
      %s294 = ssub.s32 16, 16
      %295 = vsyncadd [#allocation4], %s294
      %s297 = sshll.u32 [#allocation3], 4
      %s298 = int_to_ptr.vmem [resolvable:$true] %s297
      %300 = dma.vmem_to_hbm [thread:$0]  %s298, 16, %s7, [#allocation4]
    $region33: #{mlp_forward.1} parent=1 // pred_fallthru
      _
    // Predicated region
    $region34: #{mlp_forward.1} parent=1 // pred_check
      _
    $region35: #{mlp_forward.1} parent=1 // pred_check_branch
      %302 = sbr.rel (0) target = $region37
    $region36: #{mlp_forward.1} parent=1 // pred_region
      %303 = dma.done [#allocation4], 16
    $region37: #{mlp_forward.1} parent=1 // pred_fallthru
      _
    %304 = vsyncpa [#allocation4], 1

</llo_original>
